<compile_context>
chip_gen: v7x
topology: tpu7x:2x2x1
jax: 0.10.0
libtpu: 0.0.40
codegen_flags: <defaults>
</compile_context>

<pallas_src>
import numpy as np
import jax
import jax.numpy as jnp
from jax import lax
from jax.experimental import pallas as pl
from jax.experimental.pallas import tpu as pltpu

PATCH = 14
LN_EPS = 1e-5
HID1, HID2 = 256, 128
OUT_PAD = 128                       # lane-dense padded width of the final Linear(128, 1)
BIAS_PACK = HID1 + HID2 + OUT_PAD   # 512


def _layernorm(x, w, b):
    mu = jnp.mean(x, axis=-1, keepdims=True)
    var = jnp.mean((x - mu) ** 2, axis=-1, keepdims=True)
    return (x - mu) * lax.rsqrt(var + LN_EPS) * w + b


def transcrowd_kernel(vec_ref, w1_ref, w23_ref, out_ref):
    """Batch-invariant CLS path of the fallback BasicTransformer + regression head.

    vec_ref : (8, W) f32, W = max(D, 512). Rows 0..5 cols [0:D] = cls, pos[0], ln1_w, ln1_b,
              ln2_w, ln2_b; row 6 cols [0:512] = [b1 (256) | b2 (128) | b3 zero-padded to 128].
    w1_ref  : (D, 256)  bf16
    w23_ref : (384,128) bf16 = [w2 (256,128) ; w3 zero-padded to (128,128)]
    out_ref : (8, 128)  f32 lane-dense; element [0, 0] is the predicted count (identical rows).
    """
    D = w1_ref.shape[0]
    cls_tok = vec_ref[0:1, 0:D]
    pos0 = vec_ref[1:2, 0:D]
    ln1_w, ln1_b = vec_ref[2:3, 0:D], vec_ref[3:4, 0:D]
    ln2_w, ln2_b = vec_ref[4:5, 0:D], vec_ref[5:6, 0:D]
    b1 = vec_ref[6:7, 0:HID1]
    b2 = vec_ref[6:7, HID1:HID1 + HID2]
    b3 = vec_ref[6:7, HID1 + HID2:HID1 + HID2 + OUT_PAD]

    # Backbone: with no token mixing, x[:, 0] == LayerNorm(cls + pos[0]) for every image.
    # Patch-embed matmul / pos-add / LayerNorm of the other tokens never reach the output and
    # are eliminated (verified against the full reference below).
    feats = _layernorm(cls_tok + pos0, ln1_w, ln1_b)               # (1, D)

    # Regression head on a single 8-sublane tile (all batch rows are identical).
    # TODO(synk): nn.Dropout is stochastic in train mode; implemented as identity (eval semantics).
    h = _layernorm(feats, ln2_w, ln2_b)                            # (1, D)
    h = jnp.broadcast_to(h, (8, D)).astype(jnp.bfloat16)           # (8, D)

    h1 = jnp.maximum(jnp.dot(h, w1_ref[...],
                             preferred_element_type=jnp.float32) + b1, 0.0)        # (8, 256)
    w2 = w23_ref[0:HID1, :]
    w3 = w23_ref[HID1:HID1 + HID2, :]
    h2 = jnp.maximum(jnp.dot(h1.astype(jnp.bfloat16), w2,
                             preferred_element_type=jnp.float32) + b2, 0.0)        # (8, 128)
    out_ref[...] = jnp.dot(h2.astype(jnp.bfloat16), w3,
                           preferred_element_type=jnp.float32) + b3                # (8, 128)


def patchify(x):
    """NCHW image -> (B*num_patches, C*14*14) with Conv2d-compatible flattening (reference only)."""
    B, C, H, W = x.shape
    Hp, Wp = H // PATCH, W // PATCH
    x = x.reshape(B, C, Hp, PATCH, Wp, PATCH)
    x = x.transpose(0, 2, 4, 1, 3, 5)                 # (B, Hp, Wp, C, ph, pw)
    return x.reshape(B * Hp * Wp, C * PATCH * PATCH)


def init_params(key, embed_dim, img_size):
    """Deterministic synthetic parameters matching the module's __init__ shapes."""
    num_patches = (img_size // PATCH) ** 2
    K = 3 * PATCH * PATCH
    ks = jax.random.split(key, 6)
    w_conv = jax.random.normal(ks[0], (embed_dim, 3, PATCH, PATCH), jnp.float32) * 0.02
    return {
        # backbone (BasicTransformer fallback — no pretrained checkpoint available)
        "w_pe": w_conv.reshape(embed_dim, K).T,                        # (K, D)
        "b_pe": jnp.zeros((1, embed_dim), jnp.float32),
        "pos": jax.random.normal(ks[1], (num_patches + 1, embed_dim), jnp.float32) * 0.02,
        "cls": jax.random.normal(ks[2], (1, embed_dim), jnp.float32) * 0.02,
        "ln1_w": jnp.ones((1, embed_dim), jnp.float32),
        "ln1_b": jnp.zeros((1, embed_dim), jnp.float32),
        # regression head: LayerNorm(weight=1, bias=0); Linear weights N(0, 0.01), bias 0
        "ln2_w": jnp.ones((1, embed_dim), jnp.float32),
        "ln2_b": jnp.zeros((1, embed_dim), jnp.float32),
        "w1": jax.random.normal(ks[3], (embed_dim, HID1), jnp.float32) * 0.01,
        "b1": jnp.zeros((1, HID1), jnp.float32),
        "w2": jax.random.normal(ks[4], (HID1, HID2), jnp.float32) * 0.01,
        "b2": jnp.zeros((1, HID2), jnp.float32),
        "w3": jax.random.normal(ks[5], (HID2, 1), jnp.float32) * 0.01,
        "b3": jnp.zeros((1, 1), jnp.float32),
    }


def pack_params(params):
    """One-time packing of the tiny parameter tensors into 3 lane/sublane-aligned VMEM slabs."""
    D = params["cls"].shape[-1]
    W = max(D, BIAS_PACK)
    vec = jnp.zeros((8, W), jnp.float32)
    vec = vec.at[0, :D].set(params["cls"][0])
    vec = vec.at[1, :D].set(params["pos"][0])
    vec = vec.at[2, :D].set(params["ln1_w"][0])
    vec = vec.at[3, :D].set(params["ln1_b"][0])
    vec = vec.at[4, :D].set(params["ln2_w"][0])
    vec = vec.at[5, :D].set(params["ln2_b"][0])
    vec = vec.at[6, 0:HID1].set(params["b1"][0])
    vec = vec.at[6, HID1:HID1 + HID2].set(params["b2"][0])
    vec = vec.at[6, HID1 + HID2].set(params["b3"][0, 0])

    w1 = params["w1"].astype(jnp.bfloat16)                                      # (D, 256)
    w3_pad = jnp.zeros((HID2, OUT_PAD), jnp.float32).at[:, 0:1].set(params["w3"])
    w23 = jnp.concatenate([params["w2"], w3_pad], axis=0).astype(jnp.bfloat16)  # (384, 128)
    return jax.device_put(vec), jax.device_put(w1), jax.device_put(w23)


def transcrowd_forward(x, packed):
    """Per-call forward: single grid point, whole-array VMEM specs, batch-invariant output."""
    vec, w1, w23 = packed
    B = x.shape[0]
    vmem = pl.BlockSpec(memory_space=pltpu.MemorySpace.VMEM)
    out = pl.pallas_call(
        transcrowd_kernel,
        out_shape=jax.ShapeDtypeStruct((8, OUT_PAD), jnp.float32),
        in_specs=[vmem, vmem, vmem],
        out_specs=vmem,
    )(vec, w1, w23)
    # The fallback backbone's CLS feature is input-independent, so every image gets the same
    # count; broadcast the single scalar over the batch (count.squeeze(-1) -> (B,)).
    return jnp.broadcast_to(out[0, 0], (B,))


def reference_forward(x, params):
    """Pure-JAX reference mirroring the FULL PyTorch forward (eval mode), incl. patch embed."""
    B = x.shape[0]
    T, D = params["pos"].shape
    P = T - 1
    pt = patchify(x) @ params["w_pe"] + params["b_pe"]
    pt = pt.reshape(B, P, D)
    cls = jnp.broadcast_to(params["cls"][None], (B, 1, D))
    toks = jnp.concatenate([cls, pt], axis=1) + params["pos"][None]
    toks = _layernorm(toks, params["ln1_w"], params["ln1_b"])
    feats = toks[:, 0, :]
    h = _layernorm(feats, params["ln2_w"], params["ln2_b"])
    h = jnp.maximum(h @ params["w1"] + params["b1"], 0.0)
    h = jnp.maximum(h @ params["w2"] + params["b2"], 0.0)
    return (h @ params["w3"] + params["b3"])[:, 0]


if __name__ == "__main__":
    key = jax.random.PRNGKey(0)
    kx, kp = jax.random.split(key)
    # model_size='small' -> embed_dim=384; img_size multiple of patch 14 -> 28 gives 4 patches.
    B, img_size, embed_dim = 2, 28, 384
    x = jax.random.normal(kx, (B, 3, img_size, img_size), jnp.float32)
    params = init_params(kp, embed_dim, img_size)

    packed = pack_params(params)          # one-time packing (hoisted out of the forward path)

    out = transcrowd_forward(x, packed)
    jax.block_until_ready(out)

    ref = reference_forward(x, params)
    assert out.shape == (B,), out.shape
    # bf16 weight packing introduces ~1% relative error on an output of magnitude ~1e-3.
    np.testing.assert_allclose(np.asarray(out), np.asarray(ref), rtol=2e-2, atol=2e-4)
    print("KERNEL_OK")
</pallas_src>

<mosaic_0001>
module attributes {stable_mosaic.version = 11 : i64} {
  func.func @transcrowd_kernel(%arg0: memref<8x512xf32, #tpu.memory_space<vmem>>, %arg1: memref<384x256xbf16, #tpu.memory_space<vmem>>, %arg2: memref<384x128xbf16, #tpu.memory_space<vmem>>, %arg3: memref<8x128xf32, #tpu.memory_space<vmem>>) attributes {dimension_semantics = [], scalar_prefetch = 0 : i64, scratch_operands = 0 : i64, tpu.core_type = #tpu.core_type<tc>} {
    %c0 = arith.constant 0 : index
    %c0_0 = arith.constant 0 : index
    %0 = vector.load %arg0[%c0, %c0_0] : memref<8x512xf32, #tpu.memory_space<vmem>>, vector<1x384xf32>
    %c1 = arith.constant 1 : index
    %c0_1 = arith.constant 0 : index
    %1 = vector.load %arg0[%c1, %c0_1] : memref<8x512xf32, #tpu.memory_space<vmem>>, vector<1x384xf32>
    %c2 = arith.constant 2 : index
    %c0_2 = arith.constant 0 : index
    %2 = vector.load %arg0[%c2, %c0_2] : memref<8x512xf32, #tpu.memory_space<vmem>>, vector<1x384xf32>
    %c3 = arith.constant 3 : index
    %c0_3 = arith.constant 0 : index
    %3 = vector.load %arg0[%c3, %c0_3] : memref<8x512xf32, #tpu.memory_space<vmem>>, vector<1x384xf32>
    %c4 = arith.constant 4 : index
    %c0_4 = arith.constant 0 : index
    %4 = vector.load %arg0[%c4, %c0_4] : memref<8x512xf32, #tpu.memory_space<vmem>>, vector<1x384xf32>
    %c5 = arith.constant 5 : index
    %c0_5 = arith.constant 0 : index
    %5 = vector.load %arg0[%c5, %c0_5] : memref<8x512xf32, #tpu.memory_space<vmem>>, vector<1x384xf32>
    %c6 = arith.constant 6 : index
    %c0_6 = arith.constant 0 : index
    %6 = vector.load %arg0[%c6, %c0_6] : memref<8x512xf32, #tpu.memory_space<vmem>>, vector<1x256xf32>
    %c6_7 = arith.constant 6 : index
    %c256 = arith.constant 256 : index
    %7 = vector.load %arg0[%c6_7, %c256] : memref<8x512xf32, #tpu.memory_space<vmem>>, vector<1x128xf32>
    %c6_8 = arith.constant 6 : index
    %c384 = arith.constant 384 : index
    %8 = vector.load %arg0[%c6_8, %c384] : memref<8x512xf32, #tpu.memory_space<vmem>>, vector<1x128xf32>
    %9 = arith.addf %0, %1 : vector<1x384xf32>
    %cst = arith.constant dense<0.000000e+00> : vector<1xf32>
    %10 = vector.multi_reduction <add>, %9, %cst [1] : vector<1x384xf32> to vector<1xf32>
    %11 = vector.shape_cast %10 : vector<1xf32> to vector<1x1xf32>
    %cst_9 = arith.constant 3.840000e+02 : f32
    %12 = vector.broadcast %cst_9 : f32 to vector<1x1xf32>
    %13 = arith.divf %11, %12 : vector<1x1xf32>
    %14 = vector.broadcast %13 : vector<1x1xf32> to vector<1x384xf32>
    %15 = arith.subf %9, %14 : vector<1x384xf32>
    %16 = arith.mulf %15, %15 : vector<1x384xf32>
    %cst_10 = arith.constant dense<0.000000e+00> : vector<1xf32>
    %17 = vector.multi_reduction <add>, %16, %cst_10 [1] : vector<1x384xf32> to vector<1xf32>
    %18 = vector.shape_cast %17 : vector<1xf32> to vector<1x1xf32>
    %cst_11 = arith.constant 3.840000e+02 : f32
    %19 = vector.broadcast %cst_11 : f32 to vector<1x1xf32>
    %20 = arith.divf %18, %19 : vector<1x1xf32>
    %21 = vector.broadcast %13 : vector<1x1xf32> to vector<1x384xf32>
    %22 = arith.subf %9, %21 : vector<1x384xf32>
    %cst_12 = arith.constant 9.99999974E-6 : f32
    %23 = vector.broadcast %cst_12 : f32 to vector<1x1xf32>
    %24 = arith.addf %20, %23 : vector<1x1xf32>
    %25 = math.rsqrt %24 : vector<1x1xf32>
    %26 = vector.broadcast %25 : vector<1x1xf32> to vector<1x384xf32>
    %27 = arith.mulf %22, %26 : vector<1x384xf32>
    %28 = arith.mulf %27, %2 : vector<1x384xf32>
    %29 = arith.addf %28, %3 : vector<1x384xf32>
    %cst_13 = arith.constant dense<0.000000e+00> : vector<1xf32>
    %30 = vector.multi_reduction <add>, %29, %cst_13 [1] : vector<1x384xf32> to vector<1xf32>
    %31 = vector.shape_cast %30 : vector<1xf32> to vector<1x1xf32>
    %cst_14 = arith.constant 3.840000e+02 : f32
    %32 = vector.broadcast %cst_14 : f32 to vector<1x1xf32>
    %33 = arith.divf %31, %32 : vector<1x1xf32>
    %34 = vector.broadcast %33 : vector<1x1xf32> to vector<1x384xf32>
    %35 = arith.subf %29, %34 : vector<1x384xf32>
    %36 = arith.mulf %35, %35 : vector<1x384xf32>
    %cst_15 = arith.constant dense<0.000000e+00> : vector<1xf32>
    %37 = vector.multi_reduction <add>, %36, %cst_15 [1] : vector<1x384xf32> to vector<1xf32>
    %38 = vector.shape_cast %37 : vector<1xf32> to vector<1x1xf32>
    %cst_16 = arith.constant 3.840000e+02 : f32
    %39 = vector.broadcast %cst_16 : f32 to vector<1x1xf32>
    %40 = arith.divf %38, %39 : vector<1x1xf32>
    %41 = vector.broadcast %33 : vector<1x1xf32> to vector<1x384xf32>
    %42 = arith.subf %29, %41 : vector<1x384xf32>
    %cst_17 = arith.constant 9.99999974E-6 : f32
    %43 = vector.broadcast %cst_17 : f32 to vector<1x1xf32>
    %44 = arith.addf %40, %43 : vector<1x1xf32>
    %45 = math.rsqrt %44 : vector<1x1xf32>
    %46 = vector.broadcast %45 : vector<1x1xf32> to vector<1x384xf32>
    %47 = arith.mulf %42, %46 : vector<1x384xf32>
    %48 = arith.mulf %47, %4 : vector<1x384xf32>
    %49 = arith.addf %48, %5 : vector<1x384xf32>
    %50 = vector.shape_cast %49 : vector<1x384xf32> to vector<1x384xf32>
    %51 = vector.broadcast %50 : vector<1x384xf32> to vector<8x384xf32>
    %52 = arith.truncf %51 : vector<8x384xf32> to vector<8x384xbf16>
    %c0_18 = arith.constant 0 : index
    %c0_19 = arith.constant 0 : index
    %53 = vector.load %arg1[%c0_18, %c0_19] : memref<384x256xbf16, #tpu.memory_space<vmem>>, vector<384x256xbf16>
    %cst_20 = arith.constant dense<0.000000e+00> : vector<8x256xf32>
    %54 = tpu.matmul %52, %53, %cst_20 {dimension_numbers = #tpu.dot_dimension_numbers<[1], [0], [0], [1], [0, 0, 1, 1], [], []>} : vector<8x384xbf16>, vector<384x256xbf16>, vector<8x256xf32> -> vector<8x256xf32>
    %55 = vector.broadcast %6 : vector<1x256xf32> to vector<8x256xf32>
    %56 = arith.addf %54, %55 : vector<8x256xf32>
    %cst_21 = arith.constant 0.000000e+00 : f32
    %57 = vector.broadcast %cst_21 : f32 to vector<8x256xf32>
    %58 = arith.maximumf %56, %57 : vector<8x256xf32>
    %c0_22 = arith.constant 0 : index
    %c0_23 = arith.constant 0 : index
    %59 = vector.load %arg2[%c0_22, %c0_23] : memref<384x128xbf16, #tpu.memory_space<vmem>>, vector<256x128xbf16>
    %c256_24 = arith.constant 256 : index
    %c0_25 = arith.constant 0 : index
    %60 = vector.load %arg2[%c256_24, %c0_25] : memref<384x128xbf16, #tpu.memory_space<vmem>>, vector<128x128xbf16>
    %61 = arith.truncf %58 : vector<8x256xf32> to vector<8x256xbf16>
    %cst_26 = arith.constant dense<0.000000e+00> : vector<8x128xf32>
    %62 = tpu.matmul %61, %59, %cst_26 {dimension_numbers = #tpu.dot_dimension_numbers<[1], [0], [0], [1], [0, 0, 1, 1], [], []>} : vector<8x256xbf16>, vector<256x128xbf16>, vector<8x128xf32> -> vector<8x128xf32>
    %63 = vector.broadcast %7 : vector<1x128xf32> to vector<8x128xf32>
    %64 = arith.addf %62, %63 : vector<8x128xf32>
    %cst_27 = arith.constant 0.000000e+00 : f32
    %65 = vector.broadcast %cst_27 : f32 to vector<8x128xf32>
    %66 = arith.maximumf %64, %65 : vector<8x128xf32>
    %67 = arith.truncf %66 : vector<8x128xf32> to vector<8x128xbf16>
    %cst_28 = arith.constant dense<0.000000e+00> : vector<8x128xf32>
    %68 = tpu.matmul %67, %60, %cst_28 {dimension_numbers = #tpu.dot_dimension_numbers<[1], [0], [0], [1], [0, 0, 1, 1], [], []>} : vector<8x128xbf16>, vector<128x128xbf16>, vector<8x128xf32> -> vector<8x128xf32>
    %69 = vector.broadcast %8 : vector<1x128xf32> to vector<8x128xf32>
    %70 = arith.addf %68, %69 : vector<8x128xf32>
    %c0_29 = arith.constant 0 : index
    %c0_30 = arith.constant 0 : index
    %71 = vector.load %arg3[%c0_29, %c0_30] : memref<8x128xf32, #tpu.memory_space<vmem>>, vector<8x128xf32>
    tpu.vector_store %arg3[%c0_29, %c0_30], %70 {strides = array<i32>} : memref<8x128xf32, #tpu.memory_space<vmem>>, vector<8x128xf32>,
    return
  }
}

</mosaic_0001>

<llo_original>
// kernel: tpu_custom_call.1
$region0: #{tpu_custom_call.1}
  #allocation0 [shape = 'u32[]', space=smem, size = 0x4, offset = 0x4, fixed_abs, tag = 'smem constant byte address 0x4 - core index']
  #allocation1 [shape = 'u32[144,128]{1,0:T(1,128)}', space=vmem, size = 0x12000, scoped, tag = 'internal scratch']
  %s0 = inlined_call_operand.hbm [shape: f32[8,512], index: 0, kind: input, shape index: {}]
  %s1 = inlined_call_operand.hbm [shape: bf16[384,256], index: 1, kind: input, shape index: {}]
  %s2 = inlined_call_operand.hbm [shape: bf16[384,128], index: 2, kind: input, shape index: {}]
  %s3 = inlined_call_operand.hbm [shape: f32[8,128], index: 3, kind: output, shape index: {}]
  %s4 = sld [smem:[#allocation0]]
  $region34: #{tpu_custom_call.1} parent=0
    _
  %s6 = ssub.s32 1, %s4
  %s7 = scalar_select 0, %s6, %s4
  $region1: #{tpu_custom_call.1} parent=0
    #allocation2 [shape = 'u8[16384]{0}', space=vmem, size = 0x4000, scoped, tag = 'input window, operand 0, single buffered']
    #allocation3 [shape = 's32[1]{0}', space=sflag, size = 0x4, scoped, tag = 'scoped memory for tpu_custom_call.1']
    #allocation4 [shape = 's32[1]{0}', space=sflag, size = 0x4, scoped, tag = 'scoped memory for tpu_custom_call.1']
    #allocation5 [shape = 'u8[196608]{0}', space=vmem, size = 0x30000, scoped, tag = 'input window, operand 1, single buffered']
    #allocation6 [shape = 's32[1]{0}', space=sflag, size = 0x4, scoped, tag = 'scoped memory for tpu_custom_call.1']
    #allocation7 [shape = 'u8[98304]{0}', space=vmem, size = 0x18000, scoped, tag = 'input window, operand 2, single buffered']
    #allocation8 [shape = 'u8[4096]{0}', space=vmem, size = 0x1000, scoped, tag = 'output window, operand 0, single buffered']
    %8 = vsyncpa [#allocation3], 0
    %9 = vsyncpa [#allocation6], 0
    %10 = vsyncpa [#allocation4], 0
    // Predicated region
    $region2: #{tpu_custom_call.1} parent=1 // pred_check
      _
    $region3: #{tpu_custom_call.1} parent=1 // pred_check_branch
      %12 = sbr.rel (0) target = $region5
    $region4: #{tpu_custom_call.1} parent=1 // pred_region
      %s14 = ssub.s32 512, 512
      %15 = vsyncadd [#allocation3], %s14
      %s17 = sshll.u32 [#allocation2], 4
      %s18 = int_to_ptr.vmem [resolvable:$true] %s17
      %20 = dma.hbm_to_vmem [thread:$0]  %s0, 512, %s18, [#allocation3]
    $region5: #{tpu_custom_call.1} parent=1 // pred_fallthru
      _
    // Predicated region
    $region6: #{tpu_custom_call.1} parent=1 // pred_check
      _
    $region7: #{tpu_custom_call.1} parent=1 // pred_check_branch
      %22 = sbr.rel (0) target = $region9
    $region8: #{tpu_custom_call.1} parent=1 // pred_region
      %s24 = ssub.s32 6144, 6144
      %25 = vsyncadd [#allocation6], %s24
      %s26 = sshll.u32 [#allocation5], 4
      %s27 = int_to_ptr.vmem [resolvable:$true] %s26
      %32 = dma.hbm_to_vmem [thread:$0]  %s1, 6144, %s27, [#allocation6], 128, 128, 8
    $region9: #{tpu_custom_call.1} parent=1 // pred_fallthru
      _
    // Predicated region
    $region10: #{tpu_custom_call.1} parent=1 // pred_check
      _
    $region11: #{tpu_custom_call.1} parent=1 // pred_check_branch
      %34 = sbr.rel (0) target = $region13
    $region12: #{tpu_custom_call.1} parent=1 // pred_region
      %s36 = ssub.s32 3072, 3072
      %37 = vsyncadd [#allocation6], %s36
      %s38 = sshll.u32 [#allocation7], 4
      %s39 = int_to_ptr.vmem [resolvable:$true] %s38
      %44 = dma.hbm_to_vmem [thread:$0]  %s2, 3072, %s39, [#allocation6], 64, 64, 4
    $region13: #{tpu_custom_call.1} parent=1 // pred_fallthru
      _
    // Predicated region
    $region14: #{tpu_custom_call.1} parent=1 // pred_check
      _
    $region15: #{tpu_custom_call.1} parent=1 // pred_check_branch
      %46 = sbr.rel (0) target = $region17
    $region16: #{tpu_custom_call.1} parent=1 // pred_region
      %47 = dma.done [#allocation3], 512
    $region17: #{tpu_custom_call.1} parent=1 // pred_fallthru
      _
    // Predicated region
    $region18: #{tpu_custom_call.1} parent=1 // pred_check
      _
    $region19: #{tpu_custom_call.1} parent=1 // pred_check_branch
      %49 = sbr.rel (0) target = $region21
    $region20: #{tpu_custom_call.1} parent=1 // pred_region
      %50 = dma.done [#allocation6], 6144
    $region21: #{tpu_custom_call.1} parent=1 // pred_fallthru
      _
    // Predicated region
    $region22: #{tpu_custom_call.1} parent=1 // pred_check
      _
    $region23: #{tpu_custom_call.1} parent=1 // pred_check_branch
      %52 = sbr.rel (0) target = $region25
    $region24: #{tpu_custom_call.1} parent=1 // pred_region
      %53 = dma.done [#allocation6], 3072
    $region25: #{tpu_custom_call.1} parent=1 // pred_fallthru
      _
    %v55 = vld [vmem:[#allocation2] ss:$8 sm:$0x7]
    %s56 = scalar_lea.vmem [#allocation2], 1
    %v57 = vld [vmem:[%s56] ss:$8 sm:$0x7]
    %s58 = scalar_lea.vmem [#allocation2], 2
    %v59 = vld [vmem:[%s58] ss:$8 sm:$0x7]
    %s60 = scalar_lea.vmem [#allocation2], 3
    %v61 = vld [vmem:[%s60] ss:$8 sm:$0x7]
    %s62 = scalar_lea.vmem [#allocation2], 4
    %v63 = vld [vmem:[%s62] ss:$8 sm:$0x7]
    %s64 = scalar_lea.vmem [#allocation2], 5
    %v65 = vld [vmem:[%s64] ss:$8 sm:$0x7]
    %s66 = scalar_lea.vmem [#allocation2], 6
    %v67 = vld [vmem:[%s66] ss:$8 sm:$0x3]
    %v68 = vld [vmem:[#allocation2 + $0x16] ss:$0 sm:$0xff]
    %v69 = vld [vmem:[#allocation2 + $0x1e] ss:$0 sm:$0xff]
    %v70 = vadd.f32 %v55, %v57
    %v72 = vlaneseq
    %v73 = vshrl.u32 %v72, 7
    %v74 = vsub.s32 0, %v73
    %v75 = vrot.slane %v70, %v74
    %v76 = vlaneseq
    %v77 = vshrl.u32 %v76, 7
    %v78 = vsub.s32 1, %v77
    %v79 = vrot.slane %v70, %v78
    %v80 = vlaneseq
    %v81 = vshrl.u32 %v80, 7
    %v82 = vsub.s32 2, %v81
    %v83 = vrot.slane %v70, %v82
    %vm87 = vcmask 1040384
    %v88 = vsel %vm87, %v75, 0.0
    %v89 = vsel %vm87, %v79, 0.0
    %v90 = vadd.f32 %v88, %v89
    %v91 = vsel %vm87, %v83, 0.0
    %v92 = vadd.f32 %v90, %v91
    %93 = vadd.xlane.f32.xlu0 %v92
    %v94 = vpop.xlane.xlu0 %93
    %v95 = vrcp.pop 384.0
    %v96 = vmul.f32 %v94, %v95
    %v98 = vlaneseq
    %v99 = vshrl.u32 %v98, 7
    %v100 = vsub.s32 0, %v99
    %v101 = vrot.slane %v96, %v100
    %v103 = vsub.f32 %v70, %v101
    %v104 = vmul.f32 %v103, %v103
    %v106 = vlaneseq
    %v107 = vshrl.u32 %v106, 7
    %v108 = vsub.s32 0, %v107
    %v109 = vrot.slane %v104, %v108
    %v110 = vlaneseq
    %v111 = vshrl.u32 %v110, 7
    %v112 = vsub.s32 1, %v111
    %v113 = vrot.slane %v104, %v112
    %v114 = vlaneseq
    %v115 = vshrl.u32 %v114, 7
    %v116 = vsub.s32 2, %v115
    %v117 = vrot.slane %v104, %v116
    %v121 = vsel %vm87, %v109, 0.0
    %v122 = vsel %vm87, %v113, 0.0
    %v123 = vadd.f32 %v121, %v122
    %v124 = vsel %vm87, %v117, 0.0
    %v125 = vadd.f32 %v123, %v124
    %126 = vadd.xlane.f32.xlu0 %v125
    %v127 = vpop.xlane.xlu0 %126
    %v128 = vmul.f32 %v127, %v95
    %v129 = vadd.f32 %v128, 1e-05
    %v130 = vrsqrt.pop %v129
    %v132 = vlaneseq
    %v133 = vshrl.u32 %v132, 7
    %v134 = vsub.s32 0, %v133
    %v135 = vrot.slane %v130, %v134
    %v137 = vmul.f32 %v103, %v135
    %v138 = vmul.f32 %v137, %v59
    %v139 = vadd.f32 %v138, %v61
    %v141 = vlaneseq
    %v142 = vshrl.u32 %v141, 7
    %v143 = vsub.s32 0, %v142
    %v144 = vrot.slane %v139, %v143
    %v145 = vlaneseq
    %v146 = vshrl.u32 %v145, 7
    %v147 = vsub.s32 1, %v146
    %v148 = vrot.slane %v139, %v147
    %v149 = vlaneseq
    %v150 = vshrl.u32 %v149, 7
    %v151 = vsub.s32 2, %v150
    %v152 = vrot.slane %v139, %v151
    %v156 = vsel %vm87, %v144, 0.0
    %v157 = vsel %vm87, %v148, 0.0
    %v158 = vadd.f32 %v156, %v157
    %v159 = vsel %vm87, %v152, 0.0
    %v160 = vadd.f32 %v158, %v159
    %161 = vadd.xlane.f32.xlu0 %v160
    %v162 = vpop.xlane.xlu0 %161
    %v163 = vmul.f32 %v162, %v95
    %v165 = vlaneseq
    %v166 = vshrl.u32 %v165, 7
    %v167 = vsub.s32 0, %v166
    %v168 = vrot.slane %v163, %v167
    %v170 = vsub.f32 %v139, %v168
    %v171 = vmul.f32 %v170, %v170
    %v173 = vlaneseq
    %v174 = vshrl.u32 %v173, 7
    %v175 = vsub.s32 0, %v174
    %v176 = vrot.slane %v171, %v175
    %v177 = vlaneseq
    %v178 = vshrl.u32 %v177, 7
    %v179 = vsub.s32 1, %v178
    %v180 = vrot.slane %v171, %v179
    %v181 = vlaneseq
    %v182 = vshrl.u32 %v181, 7
    %v183 = vsub.s32 2, %v182
    %v184 = vrot.slane %v171, %v183
    %v188 = vsel %vm87, %v176, 0.0
    %v189 = vsel %vm87, %v180, 0.0
    %v190 = vadd.f32 %v188, %v189
    %v191 = vsel %vm87, %v184, 0.0
    %v192 = vadd.f32 %v190, %v191
    %193 = vadd.xlane.f32.xlu0 %v192
    %v194 = vpop.xlane.xlu0 %193
    %v195 = vmul.f32 %v194, %v95
    %v196 = vadd.f32 %v195, 1e-05
    %v197 = vrsqrt.pop %v196
    %v199 = vlaneseq
    %v200 = vshrl.u32 %v199, 7
    %v201 = vsub.s32 0, %v200
    %v202 = vrot.slane %v197, %v201
    %v204 = vmul.f32 %v170, %v202
    %v205 = vmul.f32 %v204, %v63
    %v206 = vadd.f32 %v205, %v65
    %v208 = vlaneseq
    %v209 = vshrl.u32 %v208, 7
    %v210 = vsub.s32 0, %v209
    %v211 = vrot.slane %v206, %v210
    %v212 = vlaneseq
    %v213 = vshrl.u32 %v212, 7
    %v214 = vsub.s32 1, %v213
    %v215 = vrot.slane %v206, %v214
    %v216 = vlaneseq
    %v217 = vshrl.u32 %v216, 7
    %v218 = vsub.s32 2, %v217
    %v219 = vrot.slane %v206, %v218
    %v223 = vpack.c.bf16 %v211, %v211
    %v224 = vpack.c.bf16 %v215, %v215
    %v225 = vpack.c.bf16 %v219, %v219
    %v226 = vld [vmem:[#allocation5] sm:$0xff]
    %v227 = vld [vmem:[#allocation5 + $0x8] sm:$0xff]
    %v228 = vld [vmem:[#allocation5 + $0x10] sm:$0xff]
    %v229 = vld [vmem:[#allocation5 + $0x18] sm:$0xff]
    %v230 = vld [vmem:[#allocation5 + $0x20] sm:$0xff]
    %v231 = vld [vmem:[#allocation5 + $0x28] sm:$0xff]
    %v232 = vld [vmem:[#allocation5 + $0x30] sm:$0xff]
    %v233 = vld [vmem:[#allocation5 + $0x38] sm:$0xff]
    %v234 = vld [vmem:[#allocation5 + $0x40] sm:$0xff]
    %v235 = vld [vmem:[#allocation5 + $0x48] sm:$0xff]
    %v236 = vld [vmem:[#allocation5 + $0x50] sm:$0xff]
    %v237 = vld [vmem:[#allocation5 + $0x58] sm:$0xff]
    %v238 = vld [vmem:[#allocation5 + $0x60] sm:$0xff]
    %v239 = vld [vmem:[#allocation5 + $0x68] sm:$0xff]
    %v240 = vld [vmem:[#allocation5 + $0x70] sm:$0xff]
    %v241 = vld [vmem:[#allocation5 + $0x78] sm:$0xff]
    %v242 = vld [vmem:[#allocation5 + $0x80] sm:$0xff]
    %v243 = vld [vmem:[#allocation5 + $0x88] sm:$0xff]
    %v244 = vld [vmem:[#allocation5 + $0x90] sm:$0xff]
    %v245 = vld [vmem:[#allocation5 + $0x98] sm:$0xff]
    %v246 = vld [vmem:[#allocation5 + $0xa0] sm:$0xff]
    %v247 = vld [vmem:[#allocation5 + $0xa8] sm:$0xff]
    %v248 = vld [vmem:[#allocation5 + $0xb0] sm:$0xff]
    %v249 = vld [vmem:[#allocation5 + $0xb8] sm:$0xff]
    %v250 = vld [vmem:[#allocation5 + $0xc0] sm:$0xff]
    %v251 = vld [vmem:[#allocation5 + $0xc8] sm:$0xff]
    %v252 = vld [vmem:[#allocation5 + $0xd0] sm:$0xff]
    %v253 = vld [vmem:[#allocation5 + $0xd8] sm:$0xff]
    %v254 = vld [vmem:[#allocation5 + $0xe0] sm:$0xff]
    %v255 = vld [vmem:[#allocation5 + $0xe8] sm:$0xff]
    %v256 = vld [vmem:[#allocation5 + $0xf0] sm:$0xff]
    %v257 = vld [vmem:[#allocation5 + $0xf8] sm:$0xff]
    %v258 = vld [vmem:[#allocation5 + $0x100] sm:$0xff]
    %v259 = vld [vmem:[#allocation5 + $0x108] sm:$0xff]
    %v260 = vld [vmem:[#allocation5 + $0x110] sm:$0xff]
    %v261 = vld [vmem:[#allocation5 + $0x118] sm:$0xff]
    %v262 = vld [vmem:[#allocation5 + $0x120] sm:$0xff]
    %v263 = vld [vmem:[#allocation5 + $0x128] sm:$0xff]
    %v264 = vld [vmem:[#allocation5 + $0x130] sm:$0xff]
    %v265 = vld [vmem:[#allocation5 + $0x138] sm:$0xff]
    %v266 = vld [vmem:[#allocation5 + $0x140] sm:$0xff]
    %v267 = vld [vmem:[#allocation5 + $0x148] sm:$0xff]
    %v268 = vld [vmem:[#allocation5 + $0x150] sm:$0xff]
    %v269 = vld [vmem:[#allocation5 + $0x158] sm:$0xff]
    %v270 = vld [vmem:[#allocation5 + $0x160] sm:$0xff]
    %v271 = vld [vmem:[#allocation5 + $0x168] sm:$0xff]
    %v272 = vld [vmem:[#allocation5 + $0x170] sm:$0xff]
    %v273 = vld [vmem:[#allocation5 + $0x178] sm:$0xff]
    %v275 = vlaneseq
    %v276 = vshrl.u32 %v275, 7
    %v277 = vsub.s32 0, %v276
    %v278 = vrot.slane %v67, %v277
    %v279 = vlaneseq
    %v280 = vshrl.u32 %v279, 7
    %v281 = vsub.s32 1, %v280
    %v282 = vrot.slane %v67, %v281
    %v333 = vunpack.c.l.b16 %v226
    %v334 = vunpack.c.h.b16 %v226
    %v335 = vunpack.c.l.b16 %v227
    %v336 = vunpack.c.h.b16 %v227
    %v337 = vunpack.c.l.b16 %v228
    %v338 = vunpack.c.h.b16 %v228
    %v339 = vunpack.c.l.b16 %v229
    %v340 = vunpack.c.h.b16 %v229
    %v341 = vunpack.c.l.b16 %v230
    %v342 = vunpack.c.h.b16 %v230
    %v343 = vunpack.c.l.b16 %v231
    %v344 = vunpack.c.h.b16 %v231
    %v345 = vunpack.c.l.b16 %v232
    %v346 = vunpack.c.h.b16 %v232
    %v347 = vunpack.c.l.b16 %v233
    %v348 = vunpack.c.h.b16 %v233
    %v349 = vunpack.c.l.b16 %v234
    %v350 = vunpack.c.h.b16 %v234
    %v351 = vunpack.c.l.b16 %v235
    %v352 = vunpack.c.h.b16 %v235
    %v353 = vunpack.c.l.b16 %v236
    %v354 = vunpack.c.h.b16 %v236
    %v355 = vunpack.c.l.b16 %v237
    %v356 = vunpack.c.h.b16 %v237
    %v357 = vunpack.c.l.b16 %v238
    %v358 = vunpack.c.h.b16 %v238
    %v359 = vunpack.c.l.b16 %v239
    %v360 = vunpack.c.h.b16 %v239
    %v361 = vunpack.c.l.b16 %v240
    %v362 = vunpack.c.h.b16 %v240
    %v363 = vunpack.c.l.b16 %v241
    %v364 = vunpack.c.h.b16 %v241
    %v365 = vunpack.c.l.b16 %v242
    %v366 = vunpack.c.h.b16 %v242
    %v367 = vunpack.c.l.b16 %v243
    %v368 = vunpack.c.h.b16 %v243
    %v369 = vunpack.c.l.b16 %v244
    %v370 = vunpack.c.h.b16 %v244
    %v371 = vunpack.c.l.b16 %v245
    %v372 = vunpack.c.h.b16 %v245
    %v373 = vunpack.c.l.b16 %v246
    %v374 = vunpack.c.h.b16 %v246
    %v375 = vunpack.c.l.b16 %v247
    %v376 = vunpack.c.h.b16 %v247
    %v377 = vunpack.c.l.b16 %v248
    %v378 = vunpack.c.h.b16 %v248
    %v379 = vunpack.c.l.b16 %v249
    %v380 = vunpack.c.h.b16 %v249
    %v381 = vunpack.c.l.b16 %v250
    %v382 = vunpack.c.h.b16 %v250
    %v383 = vunpack.c.l.b16 %v251
    %v384 = vunpack.c.h.b16 %v251
    %v385 = vunpack.c.l.b16 %v252
    %v386 = vunpack.c.h.b16 %v252
    %v387 = vunpack.c.l.b16 %v253
    %v388 = vunpack.c.h.b16 %v253
    %v389 = vunpack.c.l.b16 %v254
    %v390 = vunpack.c.h.b16 %v254
    %v391 = vunpack.c.l.b16 %v255
    %v392 = vunpack.c.h.b16 %v255
    %v393 = vunpack.c.l.b16 %v256
    %v394 = vunpack.c.h.b16 %v256
    %v395 = vunpack.c.l.b16 %v257
    %v396 = vunpack.c.h.b16 %v257
    %v397 = vunpack.c.l.b16 %v258
    %v398 = vunpack.c.h.b16 %v258
    %v399 = vunpack.c.l.b16 %v259
    %v400 = vunpack.c.h.b16 %v259
    %v401 = vunpack.c.l.b16 %v260
    %v402 = vunpack.c.h.b16 %v260
    %v403 = vunpack.c.l.b16 %v261
    %v404 = vunpack.c.h.b16 %v261
    %v405 = vunpack.c.l.b16 %v262
    %v406 = vunpack.c.h.b16 %v262
    %v407 = vunpack.c.l.b16 %v263
    %v408 = vunpack.c.h.b16 %v263
    %v409 = vunpack.c.l.b16 %v264
    %v410 = vunpack.c.h.b16 %v264
    %v411 = vunpack.c.l.b16 %v265
    %v412 = vunpack.c.h.b16 %v265
    %v413 = vunpack.c.l.b16 %v266
    %v414 = vunpack.c.h.b16 %v266
    %v415 = vunpack.c.l.b16 %v267
    %v416 = vunpack.c.h.b16 %v267
    %v417 = vunpack.c.l.b16 %v268
    %v418 = vunpack.c.h.b16 %v268
    %v419 = vunpack.c.l.b16 %v269
    %v420 = vunpack.c.h.b16 %v269
    %v421 = vunpack.c.l.b16 %v270
    %v422 = vunpack.c.h.b16 %v270
    %v423 = vunpack.c.l.b16 %v271
    %v424 = vunpack.c.h.b16 %v271
    %v425 = vunpack.c.l.b16 %v272
    %v426 = vunpack.c.h.b16 %v272
    %v427 = vunpack.c.l.b16 %v273
    %v428 = vunpack.c.h.b16 %v273
    %v429 = vpack.c.b16 %v335, %v333
    %v430 = vpack.c.b16 %v336, %v334
    %v431 = vpack.c.b16 %v339, %v337
    %v432 = vpack.c.b16 %v340, %v338
    %v433 = vpack.c.b16 %v343, %v341
    %v434 = vpack.c.b16 %v344, %v342
    %v435 = vpack.c.b16 %v347, %v345
    %v436 = vpack.c.b16 %v348, %v346
    %v437 = vpack.c.b16 %v351, %v349
    %v438 = vpack.c.b16 %v352, %v350
    %v439 = vpack.c.b16 %v355, %v353
    %v440 = vpack.c.b16 %v356, %v354
    %v441 = vpack.c.b16 %v359, %v357
    %v442 = vpack.c.b16 %v360, %v358
    %v443 = vpack.c.b16 %v363, %v361
    %v444 = vpack.c.b16 %v364, %v362
    %v445 = vpack.c.b16 %v367, %v365
    %v446 = vpack.c.b16 %v368, %v366
    %v447 = vpack.c.b16 %v371, %v369
    %v448 = vpack.c.b16 %v372, %v370
    %v449 = vpack.c.b16 %v375, %v373
    %v450 = vpack.c.b16 %v376, %v374
    %v451 = vpack.c.b16 %v379, %v377
    %v452 = vpack.c.b16 %v380, %v378
    %v453 = vpack.c.b16 %v383, %v381
    %v454 = vpack.c.b16 %v384, %v382
    %v455 = vpack.c.b16 %v387, %v385
    %v456 = vpack.c.b16 %v388, %v386
    %v457 = vpack.c.b16 %v391, %v389
    %v458 = vpack.c.b16 %v392, %v390
    %v459 = vpack.c.b16 %v395, %v393
    %v460 = vpack.c.b16 %v396, %v394
    %v461 = vpack.c.b16 %v399, %v397
    %v462 = vpack.c.b16 %v400, %v398
    %v463 = vpack.c.b16 %v403, %v401
    %v464 = vpack.c.b16 %v404, %v402
    %v465 = vpack.c.b16 %v407, %v405
    %v466 = vpack.c.b16 %v408, %v406
    %v467 = vpack.c.b16 %v411, %v409
    %v468 = vpack.c.b16 %v412, %v410
    %v469 = vpack.c.b16 %v415, %v413
    %v470 = vpack.c.b16 %v416, %v414
    %v471 = vpack.c.b16 %v419, %v417
    %v472 = vpack.c.b16 %v420, %v418
    %v473 = vpack.c.b16 %v423, %v421
    %v474 = vpack.c.b16 %v424, %v422
    %v475 = vpack.c.b16 %v427, %v425
    %v476 = vpack.c.b16 %v428, %v426
    %525 = vmatprep.subr.bf16.mxu0 %v430
    %526 = vmatpush1.bf16.msra.mxu0 %v429
    %527 = vmatprep.subr.bf16.mxu0 %v432
    %528 = vmatpush1.bf16.msra.mxu0 %v431
    %529 = vmatprep.subr.bf16.mxu0 %v434
    %530 = vmatpush1.bf16.msra.mxu0 %v433
    %531 = vmatprep.subr.bf16.mxu0 %v436
    %532 = vmatpush1.bf16.msra.mxu0 %v435
    %533 = vmatprep.subr.bf16.mxu0 %v438
    %534 = vmatpush1.bf16.msra.mxu0 %v437
    %535 = vmatprep.subr.bf16.mxu0 %v440
    %536 = vmatpush1.bf16.msra.mxu0 %v439
    %537 = vmatprep.subr.bf16.mxu0 %v442
    %538 = vmatpush1.bf16.msra.mxu0 %v441
    %539 = vmatprep.subr.bf16.mxu0 %v444
    %540 = vmatpush1.bf16.msra.mxu0 %v443
    %541 = vmatprep.subr.bf16.mxu0 %v446
    %542 = vmatpush1.bf16.msra.mxu0 %v445
    %543 = vmatprep.subr.bf16.mxu0 %v448
    %544 = vmatpush1.bf16.msra.mxu0 %v447
    %545 = vmatprep.subr.bf16.mxu0 %v450
    %546 = vmatpush1.bf16.msra.mxu0 %v449
    %547 = vmatprep.subr.bf16.mxu0 %v452
    %548 = vmatpush1.bf16.msra.mxu0 %v451
    %549 = vmatprep.subr.bf16.mxu0 %v454
    %550 = vmatpush1.bf16.msra.mxu0 %v453
    %551 = vmatprep.subr.bf16.mxu0 %v456
    %552 = vmatpush1.bf16.msra.mxu0 %v455
    %553 = vmatprep.subr.bf16.mxu0 %v458
    %554 = vmatpush1.bf16.msra.mxu0 %v457
    %555 = vmatprep.subr.bf16.mxu0 %v460
    %556 = vmatpush1.bf16.msra.mxu0 %v459
    %557 = vmatprep.mubr.bf16.mxu0 %v224
    %558 = vmatmul.mubr.bf16.gmra.mrb[0].mxu0 %v223
    %v559 = vpop.f32.mrb[0].mxu0
    %v560 = vadd.f32 %v278, %v559
    %v561 = vpop.f32.mrb[0].mxu0
    %v562 = vadd.f32 %v282, %v561
    %v563 = vpop.f32.mrb[0].mxu0
    %v564 = vpop.f32.mrb[0].mxu0
    %565 = vdwg.mxu0
    %566 = vmatprep.subr.bf16.mxu0 %v462
    %567 = vmatpush1.bf16.msra.mxu0 %v461
    %568 = vmatprep.subr.bf16.mxu0 %v464
    %569 = vmatpush1.bf16.msra.mxu0 %v463
    %570 = vmatprep.subr.bf16.mxu0 %v466
    %571 = vmatpush1.bf16.msra.mxu0 %v465
    %572 = vmatprep.subr.bf16.mxu0 %v468
    %573 = vmatpush1.bf16.msra.mxu0 %v467
    %574 = vmatprep.subr.bf16.mxu0 %v470
    %575 = vmatpush1.bf16.msra.mxu0 %v469
    %576 = vmatprep.subr.bf16.mxu0 %v472
    %577 = vmatpush1.bf16.msra.mxu0 %v471
    %578 = vmatprep.subr.bf16.mxu0 %v474
    %579 = vmatpush1.bf16.msra.mxu0 %v473
    %580 = vmatprep.subr.bf16.mxu0 %v476
    %581 = vmatpush1.bf16.msra.mxu0 %v475
    %582 = vmatprep.subr.bf16.mxu0 0
    %583 = vmatpush1.bf16.msra.mxu0 0
    %584 = vmatprep.subr.bf16.mxu0 0
    %585 = vmatpush1.bf16.msra.mxu0 0
    %586 = vmatprep.subr.bf16.mxu0 0
    %587 = vmatpush1.bf16.msra.mxu0 0
    %588 = vmatprep.subr.bf16.mxu0 0
    %589 = vmatpush1.bf16.msra.mxu0 0
    %590 = vmatprep.subr.bf16.mxu0 0
    %591 = vmatpush1.bf16.msra.mxu0 0
    %592 = vmatprep.subr.bf16.mxu0 0
    %593 = vmatpush1.bf16.msra.mxu0 0
    %594 = vmatprep.subr.bf16.mxu0 0
    %595 = vmatpush1.bf16.msra.mxu0 0
    %596 = vmatprep.subr.bf16.mxu0 0
    %597 = vmatpush1.bf16.msra.mxu0 0
    %598 = vmatprep.mubr.bf16.mxu0 0
    %599 = vmatmul.mubr.bf16.gmra.mrb[0].mxu0 %v225
    %v600 = vpop.f32.mrb[0].mxu0
    %v601 = vadd.f32 %v560, %v600
    %v602 = vpop.f32.mrb[0].mxu0
    %v603 = vadd.f32 %v562, %v602
    %v604 = vpop.f32.mrb[0].mxu0
    %v605 = vpop.f32.mrb[0].mxu0
    %606 = vdwg.mxu0
    %v607 = vmax.f32 %v601, 0.0
    %v608 = vmax.f32 %v603, 0.0
    %v609 = vld [vmem:[#allocation7] sm:$0xf]
    %v610 = vld [vmem:[#allocation7 + $0x4] sm:$0xf]
    %v611 = vld [vmem:[#allocation7 + $0x8] sm:$0xf]
    %v612 = vld [vmem:[#allocation7 + $0xc] sm:$0xf]
    %v613 = vld [vmem:[#allocation7 + $0x10] sm:$0xf]
    %v614 = vld [vmem:[#allocation7 + $0x14] sm:$0xf]
    %v615 = vld [vmem:[#allocation7 + $0x18] sm:$0xf]
    %v616 = vld [vmem:[#allocation7 + $0x1c] sm:$0xf]
    %v617 = vld [vmem:[#allocation7 + $0x20] sm:$0xf]
    %v618 = vld [vmem:[#allocation7 + $0x24] sm:$0xf]
    %v619 = vld [vmem:[#allocation7 + $0x28] sm:$0xf]
    %v620 = vld [vmem:[#allocation7 + $0x2c] sm:$0xf]
    %v621 = vld [vmem:[#allocation7 + $0x30] sm:$0xf]
    %v622 = vld [vmem:[#allocation7 + $0x34] sm:$0xf]
    %v623 = vld [vmem:[#allocation7 + $0x38] sm:$0xf]
    %v624 = vld [vmem:[#allocation7 + $0x3c] sm:$0xf]
    %v625 = vld [vmem:[#allocation7 + $0x40] sm:$0xf]
    %v626 = vld [vmem:[#allocation7 + $0x44] sm:$0xf]
    %v627 = vld [vmem:[#allocation7 + $0x48] sm:$0xf]
    %v628 = vld [vmem:[#allocation7 + $0x4c] sm:$0xf]
    %v629 = vld [vmem:[#allocation7 + $0x50] sm:$0xf]
    %v630 = vld [vmem:[#allocation7 + $0x54] sm:$0xf]
    %v631 = vld [vmem:[#allocation7 + $0x58] sm:$0xf]
    %v632 = vld [vmem:[#allocation7 + $0x5c] sm:$0xf]
    %v633 = vld [vmem:[#allocation7 + $0x60] sm:$0xf]
    %v634 = vld [vmem:[#allocation7 + $0x64] sm:$0xf]
    %v635 = vld [vmem:[#allocation7 + $0x68] sm:$0xf]
    %v636 = vld [vmem:[#allocation7 + $0x6c] sm:$0xf]
    %v637 = vld [vmem:[#allocation7 + $0x70] sm:$0xf]
    %v638 = vld [vmem:[#allocation7 + $0x74] sm:$0xf]
    %v639 = vld [vmem:[#allocation7 + $0x78] sm:$0xf]
    %v640 = vld [vmem:[#allocation7 + $0x7c] sm:$0xf]
    %v641 = vld [vmem:[#allocation7 + $0x80] sm:$0xf]
    %v642 = vld [vmem:[#allocation7 + $0x84] sm:$0xf]
    %v643 = vld [vmem:[#allocation7 + $0x88] sm:$0xf]
    %v644 = vld [vmem:[#allocation7 + $0x8c] sm:$0xf]
    %v645 = vld [vmem:[#allocation7 + $0x90] sm:$0xf]
    %v646 = vld [vmem:[#allocation7 + $0x94] sm:$0xf]
    %v647 = vld [vmem:[#allocation7 + $0x98] sm:$0xf]
    %v648 = vld [vmem:[#allocation7 + $0x9c] sm:$0xf]
    %v649 = vld [vmem:[#allocation7 + $0xa0] sm:$0xf]
    %v650 = vld [vmem:[#allocation7 + $0xa4] sm:$0xf]
    %v651 = vld [vmem:[#allocation7 + $0xa8] sm:$0xf]
    %v652 = vld [vmem:[#allocation7 + $0xac] sm:$0xf]
    %v653 = vld [vmem:[#allocation7 + $0xb0] sm:$0xf]
    %v654 = vld [vmem:[#allocation7 + $0xb4] sm:$0xf]
    %v655 = vld [vmem:[#allocation7 + $0xb8] sm:$0xf]
    %v656 = vld [vmem:[#allocation7 + $0xbc] sm:$0xf]
    %v657 = vpack.c.bf16 %v607, %v607
    %v658 = vpack.c.bf16 %v608, %v608
    %v691 = vunpack.c.l.b16 %v609
    %v692 = vunpack.c.l.b16 %v610
    %v693 = vunpack.c.l.b16 %v611
    %v694 = vunpack.c.l.b16 %v612
    %v695 = vunpack.c.l.b16 %v613
    %v696 = vunpack.c.l.b16 %v614
    %v697 = vunpack.c.l.b16 %v615
    %v698 = vunpack.c.l.b16 %v616
    %v699 = vunpack.c.l.b16 %v617
    %v700 = vunpack.c.l.b16 %v618
    %v701 = vunpack.c.l.b16 %v619
    %v702 = vunpack.c.l.b16 %v620
    %v703 = vunpack.c.l.b16 %v621
    %v704 = vunpack.c.l.b16 %v622
    %v705 = vunpack.c.l.b16 %v623
    %v706 = vunpack.c.l.b16 %v624
    %v707 = vunpack.c.l.b16 %v625
    %v708 = vunpack.c.l.b16 %v626
    %v709 = vunpack.c.l.b16 %v627
    %v710 = vunpack.c.l.b16 %v628
    %v711 = vunpack.c.l.b16 %v629
    %v712 = vunpack.c.l.b16 %v630
    %v713 = vunpack.c.l.b16 %v631
    %v714 = vunpack.c.l.b16 %v632
    %v715 = vunpack.c.l.b16 %v633
    %v716 = vunpack.c.l.b16 %v634
    %v717 = vunpack.c.l.b16 %v635
    %v718 = vunpack.c.l.b16 %v636
    %v719 = vunpack.c.l.b16 %v637
    %v720 = vunpack.c.l.b16 %v638
    %v721 = vunpack.c.l.b16 %v639
    %v722 = vunpack.c.l.b16 %v640
    %v723 = vpack.c.b16 %v692, %v691
    %v724 = vpack.c.b16 %v694, %v693
    %v725 = vpack.c.b16 %v696, %v695
    %v726 = vpack.c.b16 %v698, %v697
    %v727 = vpack.c.b16 %v700, %v699
    %v728 = vpack.c.b16 %v702, %v701
    %v729 = vpack.c.b16 %v704, %v703
    %v730 = vpack.c.b16 %v706, %v705
    %v731 = vpack.c.b16 %v708, %v707
    %v732 = vpack.c.b16 %v710, %v709
    %v733 = vpack.c.b16 %v712, %v711
    %v734 = vpack.c.b16 %v714, %v713
    %v735 = vpack.c.b16 %v716, %v715
    %v736 = vpack.c.b16 %v718, %v717
    %v737 = vpack.c.b16 %v720, %v719
    %v738 = vpack.c.b16 %v722, %v721
    %755 = vmatprep.subr.bf16.mxu0 0
    %756 = vmatpush1.bf16.msra.mxu0 %v723
    %757 = vmatprep.subr.bf16.mxu0 0
    %758 = vmatpush1.bf16.msra.mxu0 %v724
    %759 = vmatprep.subr.bf16.mxu0 0
    %760 = vmatpush1.bf16.msra.mxu0 %v725
    %761 = vmatprep.subr.bf16.mxu0 0
    %762 = vmatpush1.bf16.msra.mxu0 %v726
    %763 = vmatprep.subr.bf16.mxu0 0
    %764 = vmatpush1.bf16.msra.mxu0 %v727
    %765 = vmatprep.subr.bf16.mxu0 0
    %766 = vmatpush1.bf16.msra.mxu0 %v728
    %767 = vmatprep.subr.bf16.mxu0 0
    %768 = vmatpush1.bf16.msra.mxu0 %v729
    %769 = vmatprep.subr.bf16.mxu0 0
    %770 = vmatpush1.bf16.msra.mxu0 %v730
    %771 = vmatprep.subr.bf16.mxu0 0
    %772 = vmatpush1.bf16.msra.mxu0 %v731
    %773 = vmatprep.subr.bf16.mxu0 0
    %774 = vmatpush1.bf16.msra.mxu0 %v732
    %775 = vmatprep.subr.bf16.mxu0 0
    %776 = vmatpush1.bf16.msra.mxu0 %v733
    %777 = vmatprep.subr.bf16.mxu0 0
    %778 = vmatpush1.bf16.msra.mxu0 %v734
    %779 = vmatprep.subr.bf16.mxu0 0
    %780 = vmatpush1.bf16.msra.mxu0 %v735
    %781 = vmatprep.subr.bf16.mxu0 0
    %782 = vmatpush1.bf16.msra.mxu0 %v736
    %783 = vmatprep.subr.bf16.mxu0 0
    %784 = vmatpush1.bf16.msra.mxu0 %v737
    %785 = vmatprep.subr.bf16.mxu0 0
    %786 = vmatpush1.bf16.msra.mxu0 %v738
    %787 = vmatprep.mubr.bf16.mxu0 %v658
    %788 = vmatmul.mubr.bf16.gmra.mrb[0].mxu0 %v657
    %v789 = vpop.f32.mrb[0].mxu0
    %v790 = vadd.f32 %v68, %v789
    %v791 = vpop.f32.mrb[0].mxu0
    %v792 = vpop.f32.mrb[0].mxu0
    %v793 = vpop.f32.mrb[0].mxu0
    %794 = vdwg.mxu0
    %v795 = vmax.f32 %v790, 0.0
    %v796 = vpack.c.bf16 %v795, %v795
    %v813 = vunpack.c.l.b16 %v641
    %v814 = vunpack.c.l.b16 %v642
    %v815 = vunpack.c.l.b16 %v643
    %v816 = vunpack.c.l.b16 %v644
    %v817 = vunpack.c.l.b16 %v645
    %v818 = vunpack.c.l.b16 %v646
    %v819 = vunpack.c.l.b16 %v647
    %v820 = vunpack.c.l.b16 %v648
    %v821 = vunpack.c.l.b16 %v649
    %v822 = vunpack.c.l.b16 %v650
    %v823 = vunpack.c.l.b16 %v651
    %v824 = vunpack.c.l.b16 %v652
    %v825 = vunpack.c.l.b16 %v653
    %v826 = vunpack.c.l.b16 %v654
    %v827 = vunpack.c.l.b16 %v655
    %v828 = vunpack.c.l.b16 %v656
    %v829 = vpack.c.b16 %v814, %v813
    %v830 = vpack.c.b16 %v816, %v815
    %v831 = vpack.c.b16 %v818, %v817
    %v832 = vpack.c.b16 %v820, %v819
    %v833 = vpack.c.b16 %v822, %v821
    %v834 = vpack.c.b16 %v824, %v823
    %v835 = vpack.c.b16 %v826, %v825
    %v836 = vpack.c.b16 %v828, %v827
    %845 = vmatprep.subr.bf16.mxu0 0
    %846 = vmatpush1.bf16.msra.mxu0 %v829
    %847 = vmatprep.subr.bf16.mxu0 0
    %848 = vmatpush1.bf16.msra.mxu0 %v830
    %849 = vmatprep.subr.bf16.mxu0 0
    %850 = vmatpush1.bf16.msra.mxu0 %v831
    %851 = vmatprep.subr.bf16.mxu0 0
    %852 = vmatpush1.bf16.msra.mxu0 %v832
    %853 = vmatprep.subr.bf16.mxu0 0
    %854 = vmatpush1.bf16.msra.mxu0 %v833
    %855 = vmatprep.subr.bf16.mxu0 0
    %856 = vmatpush1.bf16.msra.mxu0 %v834
    %857 = vmatprep.subr.bf16.mxu0 0
    %858 = vmatpush1.bf16.msra.mxu0 %v835
    %859 = vmatprep.subr.bf16.mxu0 0
    %860 = vmatpush1.bf16.msra.mxu0 %v836
    %861 = vmatprep.subr.bf16.mxu0 0
    %862 = vmatpush1.bf16.msra.mxu0 0
    %863 = vmatprep.subr.bf16.mxu0 0
    %864 = vmatpush1.bf16.msra.mxu0 0
    %865 = vmatprep.subr.bf16.mxu0 0
    %866 = vmatpush1.bf16.msra.mxu0 0
    %867 = vmatprep.subr.bf16.mxu0 0
    %868 = vmatpush1.bf16.msra.mxu0 0
    %869 = vmatprep.subr.bf16.mxu0 0
    %870 = vmatpush1.bf16.msra.mxu0 0
    %871 = vmatprep.subr.bf16.mxu0 0
    %872 = vmatpush1.bf16.msra.mxu0 0
    %873 = vmatprep.subr.bf16.mxu0 0
    %874 = vmatpush1.bf16.msra.mxu0 0
    %875 = vmatprep.subr.bf16.mxu0 0
    %876 = vmatpush1.bf16.msra.mxu0 0
    %877 = vmatprep.mubr.bf16.mxu0 0
    %878 = vmatmul.mubr.bf16.gmra.mrb[0].mxu0 %v796
    %v879 = vpop.f32.mrb[0].mxu0
    %v880 = vadd.f32 %v69, %v879
    %v881 = vpop.f32.mrb[0].mxu0
    %v882 = vpop.f32.mrb[0].mxu0
    %v883 = vpop.f32.mrb[0].mxu0
    %884 = vdwg.mxu0
    %885 = vst [vmem:[#allocation8] sm:$0xff] %v880
    // Predicated region
    $region26: #{tpu_custom_call.1} parent=1 // pred_check
      _
    $region27: #{tpu_custom_call.1} parent=1 // pred_check_branch
      %887 = sbr.rel (0) target = $region29
    $region28: #{tpu_custom_call.1} parent=1 // pred_region
      %s889 = ssub.s32 128, 128
      %890 = vsyncadd [#allocation4], %s889
      %s892 = sshll.u32 [#allocation8], 4
      %s893 = int_to_ptr.vmem [resolvable:$true] %s892
      %895 = dma.vmem_to_hbm [thread:$0]  %s893, 128, %s3, [#allocation4]
    $region29: #{tpu_custom_call.1} parent=1 // pred_fallthru
      _
    // Predicated region
    $region30: #{tpu_custom_call.1} parent=1 // pred_check
      _
    $region31: #{tpu_custom_call.1} parent=1 // pred_check_branch
      %897 = sbr.rel (0) target = $region33
    $region32: #{tpu_custom_call.1} parent=1 // pred_region
      %898 = dma.done [#allocation4], 128
    $region33: #{tpu_custom_call.1} parent=1 // pred_fallthru
      _
    %899 = vsyncpa [#allocation3], 1
    %900 = vsyncpa [#allocation6], 1
    %901 = vsyncpa [#allocation4], 1

</llo_original>
